<compile_context>
chip_gen: v5e
topology: v5e:2x2
jax: 0.10.0
libtpu: 0.0.40
codegen_flags: <defaults>
</compile_context>

<pallas_src>
import jax
import jax.numpy as jnp
from jax.experimental import pallas as pl
from jax.experimental.pallas import tpu as pltpu


# --------------------------------------------------------------------------
# Kernel: 1x1 conv (+ bias) as one channel-major matmul on a spatial tile.
# --------------------------------------------------------------------------
def outconv_kernel(x_ref, w_ref, b_ref, o_ref):
    # x_ref: (Cin, T)   channel-major, spatial tile in lanes
    # w_ref: (Cout, Cin)
    # b_ref: (Cout, 1)
    # o_ref: (Cout, T)
    y = jnp.dot(w_ref[...], x_ref[...], preferred_element_type=jnp.float32)
    o_ref[...] = (y + b_ref[...].astype(jnp.float32)).astype(o_ref.dtype)


# --------------------------------------------------------------------------
# Generation-aware sizing
# --------------------------------------------------------------------------
def _tpu_generation_params():
    """Returns (target input bytes/step, VMEM budget for pipelined blocks, vmem_limit_bytes)."""
    try:
        kind = jax.devices()[0].device_kind.lower()
    except Exception:
        kind = ""
    if "v7" in kind:
        # v7x: ~3.2 TB/s HBM but only 64 MiB physical VMEM per TensorCore.
        return 8 << 20, 24 << 20, 48 << 20
    if "v5" in kind:
        # v5e: 128 MiB physical VMEM, 16 MiB default scoped limit -> raise it.
        return 4 << 20, 32 << 20, 64 << 20
    # v6e (and default): ~1.4 TB/s HBM, 128 MiB physical VMEM.
    return 4 << 20, 32 << 20, 64 << 20


def _pick_spatial_tile(hw, cin, cout, itemsize, n_batch, target_bytes, block_budget):
    """Largest lane-dense spatial tile that amortizes per-step overhead, fits VMEM,
    and keeps the grid non-degenerate."""
    if hw <= 128:
        return hw  # full extent is always a legal block dim
    # Bytes-per-step target: amortize ~0.35 us/step overhead against the HBM roofline.
    tile = target_bytes // max(1, cin * itemsize)
    # VMEM cap: double-buffered x and out blocks (2*(Cin+Cout)*tile*itemsize) must fit.
    tile = min(tile, block_budget // max(1, 2 * (cin + cout) * itemsize))
    # Degenerate-grid guard: with N == 1 keep >= ~8 spatial steps (pipelining + 2 TCs).
    if n_batch == 1 and hw >= 8 * 128:
        tile = min(tile, hw // 8)
    tile = max(128, (tile // 128) * 128)
    if tile >= hw:
        return hw
    # Prefer an exact multiple-of-128 divisor of HW near the target so every store is
    # an unmasked lane-dense vst; otherwise keep the non-divisor tile and let Pallas
    # mask the final partial block.
    if hw % 128 == 0:
        d = tile
        while d >= 128 and hw % d != 0:
            d -= 128
        if d >= max(128, tile // 2):
            return d
    return tile


# --------------------------------------------------------------------------
# Wrapper
# --------------------------------------------------------------------------
def outconv(x_nchw, weight, bias):
    """OutConv forward.  x_nchw: (N, Cin, H, W); weight: (Cout, Cin, 1, 1); bias: (Cout,)."""
    N, Cin, H, W = x_nchw.shape
    Cout = weight.shape[0]
    HW = H * W
    itemsize = jnp.dtype(x_nchw.dtype).itemsize

    x2 = x_nchw.reshape(N, Cin, HW)       # channel-major, spatial axis in lanes
    w2 = weight.reshape(Cout, Cin)
    b2 = bias.reshape(Cout, 1)

    target_bytes, block_budget, vmem_limit = _tpu_generation_params()
    tile = _pick_spatial_tile(HW, Cin, Cout, itemsize, N, target_bytes, block_budget)
    grid = (N, pl.cdiv(HW, tile))

    cost = pl.CostEstimate(
        flops=2 * N * HW * Cin * Cout,
        transcendentals=0,
        bytes_accessed=(itemsize * (N * Cin * HW + N * Cout * HW)
                        + jnp.dtype(weight.dtype).itemsize * Cout * Cin
                        + jnp.dtype(bias.dtype).itemsize * Cout),
    )

    out = pl.pallas_call(
        outconv_kernel,
        out_shape=jax.ShapeDtypeStruct((N, Cout, HW), x_nchw.dtype),
        grid=grid,
        in_specs=[
            pl.BlockSpec((pl.Squeezed(), Cin, tile), lambda n, s: (n, 0, s)),
            pl.BlockSpec((Cout, Cin), lambda n, s: (0, 0)),
            pl.BlockSpec((Cout, 1), lambda n, s: (0, 0)),
        ],
        out_specs=pl.BlockSpec((pl.Squeezed(), Cout, tile), lambda n, s: (n, 0, s)),
        compiler_params=pltpu.CompilerParams(
            dimension_semantics=("parallel", "parallel"),
            vmem_limit_bytes=int(vmem_limit)),
        cost_estimate=cost,
    )(x2, w2, b2)

    return out.reshape(N, Cout, H, W)


# --------------------------------------------------------------------------
# Parameter setup + pure-JAX reference
# --------------------------------------------------------------------------
def init_outconv_params(key, in_channels, out_channels):
    kw, kb = jax.random.split(key)
    # PyTorch Conv2d layout: weight (Cout, Cin, 1, 1), bias (Cout,)
    fan_in = float(in_channels)  # kernel_size = 1
    bound = 1.0 / jnp.sqrt(fan_in)
    weight = jax.random.uniform(kw, (out_channels, in_channels, 1, 1),
                                jnp.float32, -bound, bound)
    bias = jax.random.uniform(kb, (out_channels,), jnp.float32, -bound, bound)
    return {"weight": weight, "bias": bias}


def outconv_ref(x_nchw, weight, bias):
    w2 = weight.reshape(weight.shape[0], weight.shape[1])
    y = jnp.einsum("oc,nchw->nohw", w2, x_nchw)
    return y + bias[None, :, None, None]


if __name__ == "__main__":
    key = jax.random.PRNGKey(0)
    k_x, k_p = jax.random.split(key)

    N, Cin, H, W = 2, 4, 16, 16     # NCHW, as PyTorch would supply
    Cout = 2                        # OutConv(in_channels=4, out_channels=2)

    x = jax.random.normal(k_x, (N, Cin, H, W), jnp.float32)
    params = init_outconv_params(k_p, Cin, Cout)

    out = outconv(x, params["weight"], params["bias"])
    out = jax.block_until_ready(out)

    assert out.shape == (N, Cout, H, W), out.shape

    ref = jax.block_until_ready(outconv_ref(x, params["weight"], params["bias"]))
    assert jnp.allclose(out, ref, atol=1e-5, rtol=1e-5), (
        float(jnp.max(jnp.abs(out - ref))))

    print("KERNEL_OK")
</pallas_src>

<mosaic_0001>
module attributes {stable_mosaic.version = 11 : i64} {
  func.func @outconv_kernel(%arg0: i32, %arg1: i32, %arg2: memref<1x4x256xf32, #tpu.memory_space<vmem>>, %arg3: memref<2x4xf32, #tpu.memory_space<vmem>>, %arg4: memref<2x1xf32, #tpu.memory_space<vmem>>, %arg5: memref<1x2x256xf32, #tpu.memory_space<vmem>>) attributes {dimension_semantics = [#tpu.dimension_semantics<parallel>, #tpu.dimension_semantics<parallel>], iteration_bounds = array<i64: 2, 1>, scalar_prefetch = 0 : i64, scratch_operands = 0 : i64, tpu.core_type = #tpu.core_type<tc>, window_params = [{transform_indices = @transform_0, window_bounds = array<i64: 1, 4, 256>}, {pipeline_mode = #tpu.pipeline_mode<synchronous>, transform_indices = @transform_1, window_bounds = array<i64: 2, 4>}, {pipeline_mode = #tpu.pipeline_mode<synchronous>, transform_indices = @transform_2, window_bounds = array<i64: 2, 1>}, {transform_indices = @transform_3, window_bounds = array<i64: 1, 2, 256>}]} {
    %c0 = arith.constant 0 : index
    %c0_0 = arith.constant 0 : index
    %0 = vector.load %arg3[%c0, %c0_0] : memref<2x4xf32, #tpu.memory_space<vmem>>, vector<2x4xf32>
    %c0_1 = arith.constant 0 : index
    %c0_2 = arith.constant 0 : index
    %c0_3 = arith.constant 0 : index
    %1 = vector.load %arg2[%c0_1, %c0_2, %c0_3] : memref<1x4x256xf32, #tpu.memory_space<vmem>>, vector<1x4x256xf32>
    %2 = vector.shape_cast %1 : vector<1x4x256xf32> to vector<4x256xf32>
    %cst = arith.constant dense<0.000000e+00> : vector<2x256xf32>
    %3 = tpu.matmul %0, %2, %cst {dimension_numbers = #tpu.dot_dimension_numbers<[1], [0], [0], [1], [0, 0, 1, 1], [], []>} : vector<2x4xf32>, vector<4x256xf32>, vector<2x256xf32> -> vector<2x256xf32>
    %c0_4 = arith.constant 0 : index
    %c0_5 = arith.constant 0 : index
    %4 = vector.load %arg4[%c0_4, %c0_5] : memref<2x1xf32, #tpu.memory_space<vmem>>, vector<2x1xf32>
    %5 = vector.broadcast %4 : vector<2x1xf32> to vector<2x256xf32>
    %6 = arith.addf %3, %5 : vector<2x256xf32>
    %c0_6 = arith.constant 0 : index
    %c0_7 = arith.constant 0 : index
    %c0_8 = arith.constant 0 : index
    %7 = vector.load %arg5[%c0_6, %c0_7, %c0_8] : memref<1x2x256xf32, #tpu.memory_space<vmem>>, vector<1x2x256xf32>
    %8 = vector.shape_cast %7 : vector<1x2x256xf32> to vector<2x256xf32>
    %9 = vector.shape_cast %6 : vector<2x256xf32> to vector<1x2x256xf32>
    tpu.vector_store %arg5[%c0_6, %c0_7, %c0_8], %9 {strides = array<i32>} : memref<1x2x256xf32, #tpu.memory_space<vmem>>, vector<1x2x256xf32>,
    return
  }
  func.func @transform_0(%arg0: i32, %arg1: i32) -> (i32, i32, i32) {
    %c0_i32 = arith.constant 0 : i32
    %c0_i32_0 = arith.constant 0 : i32
    return %arg0, %c0_i32, %arg1 : i32, i32, i32
  }
  func.func @transform_1(%arg0: i32, %arg1: i32) -> (i32, i32) {
    %c0_i32 = arith.constant 0 : i32
    %c0_i32_0 = arith.constant 0 : i32
    %c0_i32_1 = arith.constant 0 : i32
    return %c0_i32, %c0_i32_0 : i32, i32
  }
  func.func @transform_2(%arg0: i32, %arg1: i32) -> (i32, i32) {
    %c0_i32 = arith.constant 0 : i32
    %c0_i32_0 = arith.constant 0 : i32
    %c0_i32_1 = arith.constant 0 : i32
    return %c0_i32, %c0_i32_0 : i32, i32
  }
  func.func @transform_3(%arg0: i32, %arg1: i32) -> (i32, i32, i32) {
    %c0_i32 = arith.constant 0 : i32
    %c0_i32_0 = arith.constant 0 : i32
    return %arg0, %c0_i32, %arg1 : i32, i32, i32
  }
}

</mosaic_0001>

<llo_original>
// kernel: tpu_custom_call.1
$region0: #{tpu_custom_call.1}
  #allocation0 [shape = 'u32[]', space=smem, size = 0x4, offset = 0x4, fixed_abs, tag = 'smem constant byte address 0x4 - core index']
  #allocation1 [shape = 'u32[72,128]{1,0:T(1,128)}', space=vmem, size = 0x9000, scoped, tag = 'internal scratch']
  %s0 = inlined_call_operand.hbm [shape: f32[2,4,256], index: 0, kind: input, shape index: {}]
  %s1 = inlined_call_operand.vmem [shape: f32[2,4], index: 1, kind: input, shape index: {}]
  %s2 = inlined_call_operand.vmem [shape: f32[2,1], index: 2, kind: input, shape index: {}]
  %s3 = inlined_call_operand.hbm [shape: f32[2,2,256], index: 3, kind: output, shape index: {}]
  %s4 = sld [smem:[#allocation0]]
  $region49: #{tpu_custom_call.1} parent=0
    _
  %s6 = ssub.s32 1, %s4
  %s7 = scalar_select 0, %s6, %s4
  $region1: #{tpu_custom_call.1} parent=0
    #allocation2 [shape = 'u8[8192]{0}', space=vmem, size = 0x2000, scoped, tag = 'input window, operand 0']
    #allocation3 [shape = 's32[2]{0}', space=sflag, size = 0x8, scoped, tag = 'scoped memory for tpu_custom_call.1']
    #allocation4 [shape = 's32[2]{0}', space=sflag, size = 0x8, scoped, tag = 'scoped memory for tpu_custom_call.1']
    #allocation5 [shape = 'u8[4096]{0}', space=vmem, size = 0x1000, scoped, tag = 'output window, operand 0']
    %8 = vsyncpa [#allocation3], 0
    %s9 = scalar_lea.sflag [#allocation3], 1
    %10 = vsyncpa %s9, 0
    %11 = vsyncpa [#allocation4], 0
    %s12 = scalar_lea.sflag [#allocation4], 1
    %13 = vsyncpa %s12, 0
    loop: start=0, step=1, limit=4
    $region2: #{tpu_custom_call.1} parent=1 // loop_pre_header
      _
    $region3: #{tpu_custom_call.1} parent=1 // loop_header
      %s15 = sphi 0, %s19
      %p16 = scmp.ge.s32.totalorder %s15, 4
      %s22 = sphi 0, %s34
      %s23 = sphi 0, %s30
      %s24 = sphi 0, %s22
      %s25 = sphi 0, %s23
      %s26 = sphi 0, %s24
      %s27 = sphi 0, %s25
      %s39 = sphi 0, %s41
      %s42 = sphi 0, %s39
      %s43 = sphi 0, %s42
      %s59 = sphi 0, %s43
      %s63 = sphi 0, %s63
      %s65 = sphi 0, %s63
      %s66 = sphi 0, %s65
      %s80 = sphi 0, %s66
      %s84 = sphi 0, %s84
      %s86 = sphi 0, %s84
      %s87 = sphi 0, %s86
      %s101 = sphi 0, %s87
      %s109 = sphi 0, %s111
      %s112 = sphi 0, %s109
      %s113 = sphi 0, %s112
      %s129 = sphi 0, %s113
    $region4: #{tpu_custom_call.1} parent=1 // loop_header_branch
      %18 = sbr.rel (%p16) target = $region8
    $region5: #{tpu_custom_call.1} parent=1 // loop_body
      %s20 = ssub.s32 %s15, 1
      %s21 = ssub.s32 %s15, 2
      %s28 = sadd.s32 1, %s23
      %p29 = scmp.ge.s32.totalorder %s28, 1
      %s30 = scalar_select %p29, 0, %s28
      %s31 = sadd.s32 1, %s22
      %s32 = scalar_select %p29, %s31, %s22
      %p33 = scmp.ge.s32.totalorder %s32, 2
      %s34 = scalar_select %p33, 0, %s32
      %s35 = ssub.s32 %s22, %s34
      %s36 = ssub.s32 %s23, %s30
      %s37 = sor.u32 %s35, %s36
      %p38 = scmp.eq.s32.totalorder %s37, 0
      %s40 = sadd.s32 %s39, 1
      %s41 = scalar_select %p38, %s39, %s40
      %p44 = pneg %p38
      %p45 = scmp.eq.s32.totalorder %s15, 1
      %p46 = por %p44, %p45
      %p47 = scmp.ne.s32.totalorder %s39, %s42
      %p48 = scmp.eq.s32.totalorder %s15, 0
      %p49 = por %p47, %p48
      %p50 = scmp.ne.s32.totalorder %s39, %s42
      %p51 = scmp.eq.s32.totalorder %s20, 1
      %p52 = por %p50, %p51
      %p53 = scmp.ne.s32.totalorder %s42, %s43
      %p54 = scmp.eq.s32.totalorder %s20, 0
      %p55 = por %p53, %p54
      %p56 = scmp.ne.s32.totalorder %s42, %s43
      %p57 = scmp.eq.s32.totalorder %s21, 1
      %p58 = por %p56, %p57
      %p60 = scmp.ne.s32.totalorder %s43, %s59
      %p61 = scmp.eq.s32.totalorder %s21, 0
      %p62 = por %p60, %p61
      %s64 = sadd.s32 %s63, 1
      %p67 = scmp.eq.s32.totalorder %s15, 1
      %p68 = scmp.ne.s32.totalorder %s63, %s65
      %p69 = scmp.eq.s32.totalorder %s15, 0
      %p70 = por %p68, %p69
      %p71 = scmp.ne.s32.totalorder %s63, %s65
      %p72 = scmp.eq.s32.totalorder %s20, 1
      %p73 = por %p71, %p72
      %p74 = scmp.ne.s32.totalorder %s65, %s66
      %p75 = scmp.eq.s32.totalorder %s20, 0
      %p76 = por %p74, %p75
      %p77 = scmp.ne.s32.totalorder %s65, %s66
      %p78 = scmp.eq.s32.totalorder %s21, 1
      %p79 = por %p77, %p78
      %p81 = scmp.ne.s32.totalorder %s66, %s80
      %p82 = scmp.eq.s32.totalorder %s21, 0
      %p83 = por %p81, %p82
      %s85 = sadd.s32 %s84, 1
      %p88 = scmp.eq.s32.totalorder %s15, 1
      %p89 = scmp.ne.s32.totalorder %s84, %s86
      %p90 = scmp.eq.s32.totalorder %s15, 0
      %p91 = por %p89, %p90
      %p92 = scmp.ne.s32.totalorder %s84, %s86
      %p93 = scmp.eq.s32.totalorder %s20, 1
      %p94 = por %p92, %p93
      %p95 = scmp.ne.s32.totalorder %s86, %s87
      %p96 = scmp.eq.s32.totalorder %s20, 0
      %p97 = por %p95, %p96
      %p98 = scmp.ne.s32.totalorder %s86, %s87
      %p99 = scmp.eq.s32.totalorder %s21, 1
      %p100 = por %p98, %p99
      %p102 = scmp.ne.s32.totalorder %s87, %s101
      %p103 = scmp.eq.s32.totalorder %s21, 0
      %p104 = por %p102, %p103
      %s105 = ssub.s32 %s22, %s34
      %s106 = ssub.s32 %s23, %s30
      %s107 = sor.u32 %s105, %s106
      %p108 = scmp.eq.s32.totalorder %s107, 0
      %s110 = sadd.s32 %s109, 1
      %s111 = scalar_select %p108, %s109, %s110
      %p114 = pneg %p108
      %p115 = scmp.eq.s32.totalorder %s15, 1
      %p116 = por %p114, %p115
      %p117 = scmp.ne.s32.totalorder %s109, %s112
      %p118 = scmp.eq.s32.totalorder %s15, 0
      %p119 = por %p117, %p118
      %p120 = scmp.ne.s32.totalorder %s109, %s112
      %p121 = scmp.eq.s32.totalorder %s20, 1
      %p122 = por %p120, %p121
      %p123 = scmp.ne.s32.totalorder %s112, %s113
      %p124 = scmp.eq.s32.totalorder %s20, 0
      %p125 = por %p123, %p124
      %p126 = scmp.ne.s32.totalorder %s112, %s113
      %p127 = scmp.eq.s32.totalorder %s21, 1
      %p128 = por %p126, %p127
      %p130 = scmp.ne.s32.totalorder %s113, %s129
      %p131 = scmp.eq.s32.totalorder %s21, 0
      %p132 = por %p130, %p131
      %p133 = scmp.le.s32.totalorder 1, %s15
      %p134 = scmp.lt.s32.totalorder %s15, 3
      %p135 = pnand %p133, %p134
      %p136 = pneg %p135
      // Predicated region
      $region9: #{tpu_custom_call.1} parent=5 // pred_check
        _
      $region10: #{tpu_custom_call.1} parent=5 // pred_check_branch
        %138 = sbr.rel (%p135) target = $region12
      $region11: #{tpu_custom_call.1} parent=5 // pred_region
        %s139 = ssub.s32 %s15, 1
        // Predicated region
        $region13: #{tpu_custom_call.1} parent=11 // pred_check
          %p140 = pneg %p76
        $region14: #{tpu_custom_call.1} parent=11 // pred_check_branch
          %142 = sbr.rel (%p140) target = $region16
        $region15: #{tpu_custom_call.1} parent=11 // pred_region
          _
        $region16: #{tpu_custom_call.1} parent=11 // pred_fallthru
          _
        // Predicated region
        $region17: #{tpu_custom_call.1} parent=11 // pred_check
          %p143 = pneg %p97
        $region18: #{tpu_custom_call.1} parent=11 // pred_check_branch
          %145 = sbr.rel (%p143) target = $region20
        $region19: #{tpu_custom_call.1} parent=11 // pred_region
          _
        $region20: #{tpu_custom_call.1} parent=11 // pred_fallthru
          _
      $region12: #{tpu_custom_call.1} parent=5 // pred_fallthru
        _
      %p146 = scmp.lt.s32.totalorder %s15, 2
      // Predicated region
      $region21: #{tpu_custom_call.1} parent=5 // pred_check
        %p147 = pneg %p146
      $region22: #{tpu_custom_call.1} parent=5 // pred_check_branch
        %149 = sbr.rel (%p147) target = $region24
      $region23: #{tpu_custom_call.1} parent=5 // pred_region
        // Predicated region
        $region25: #{tpu_custom_call.1} parent=23 // pred_check
          %p150 = pneg %p49
        $region26: #{tpu_custom_call.1} parent=23 // pred_check_branch
          %152 = sbr.rel (%p150) target = $region28
        $region27: #{tpu_custom_call.1} parent=23 // pred_region
          %s153 = sand.u32 %s39, 1
          %s154 = scalar_lea.sflag [#allocation3], %s153
          %s155 = sand.u32 %s39, 1
          %s156 = smul.addr %s155, 8
          %s157 = scalar_lea.vmem [#allocation2], %s156
          %s158 = smul.u32 2, %s23
          %160 = vsyncadd %s154, 0
          %s161 = smul.addr %s22, 2
          %s162 = sadd.s32 %s158, %s161
          %s163 = smul.addr %s162, 4
          %s164 = scalar_lea.hbm %s0, %s163
          %s166 = sshll.u32 %s164, 4
          %s167 = int_to_ptr.hbm [resolvable:$true] %s166
          %s168 = sshll.u32 %s157, 4
          %s169 = int_to_ptr.vmem [resolvable:$true] %s168
          %171 = dma.hbm_to_vmem [thread:$0]  %s167, 128, %s169, %s154
        $region28: #{tpu_custom_call.1} parent=23 // pred_fallthru
          _
      $region24: #{tpu_custom_call.1} parent=5 // pred_fallthru
        _
      %p172 = scmp.le.s32.totalorder 1, %s15
      %p173 = scmp.lt.s32.totalorder %s15, 3
      %p174 = pnand %p172, %p173
      %p175 = pneg %p174
      // Predicated region
      $region29: #{tpu_custom_call.1} parent=5 // pred_check
        _
      $region30: #{tpu_custom_call.1} parent=5 // pred_check_branch
        %177 = sbr.rel (%p174) target = $region32
      $region31: #{tpu_custom_call.1} parent=5 // pred_region
        %s178 = ssub.s32 %s15, 1
        %s179 = sand.u32 %s42, 1
        %s180 = scalar_lea.sflag [#allocation3], %s179
        %s181 = sand.u32 %s42, 1
        %s182 = smul.addr %s181, 8
        %s183 = scalar_lea.vmem [#allocation2], %s182
        // Predicated region
        $region33: #{tpu_custom_call.1} parent=31 // pred_check
          %p184 = pneg %p55
        $region34: #{tpu_custom_call.1} parent=31 // pred_check_branch
          %186 = sbr.rel (%p184) target = $region36
        $region35: #{tpu_custom_call.1} parent=31 // pred_region
          %188 = dma.done %s180, 128
        $region36: #{tpu_custom_call.1} parent=31 // pred_fallthru
          _
        %s189 = sand.u32 %s42, 1
        %s190 = scalar_lea.sflag [#allocation3], %s189
        %s191 = sand.u32 %s42, 1
        %s192 = smul.addr %s191, 8
        %s193 = scalar_lea.vmem [#allocation2], %s192
        %p194 = pneg %p55
        %p195 = pneg %p52
        %p196 = pneg %p76
        %p197 = pneg %p73
        %p198 = pneg %p97
        %p199 = pneg %p94
        %p200 = pneg %p125
        %p201 = pneg %p122
        %s202 = sand.u32 %s112, 1
        %s203 = scalar_lea.sflag [#allocation4], %s202
        %s204 = sand.u32 %s112, 1
        %s205 = smul.addr %s204, 4
        %s206 = scalar_lea.vmem [#allocation5], %s205
        %s207 = smul.u32 2, %s25
        %s208 = smul.u32 2, %s25
        %v209 = vld [vmem:[%s1] sm:$0x3]
        %v210 = vld [vmem:[%s183] sm:$0xff]
        %v211 = vld [vmem:[%s2] sm:$0x3]
        %213 = vset.pattern.permute.xlu0 0
        %214 = vperm.xlu0 %213, %v211
        %v215 = vpop.permute.xlu0 %214
        %218 = vst [vmem:[#allocation1] ss:$2 sm:$0xff] %v210
        %v219 = vld.sshfl [vmem:[#allocation1] sm:$0xff pattern:$0x75316420]
        %v220 = vld.sshfl [vmem:[#allocation1 + $0x8] sm:$0xff pattern:$0x75316420]
        %vm221 = vcmask 31744
        %v223 = vsel %vm221, %v209, 0
        %vm225 = vcmask 1043456
        %v226 = vsel %vm225, %v219, 0
        %v228 = vsel %vm225, %v220, 0
        %230 = vmatpush.msra.mxu0 0.0
        %231 = vmatpush.msra.mxu0 0.0
        %232 = vmatpush.msra.mxu0 0.0
        %233 = vmatpush.msra.mxu0 0.0
        %234 = vmatpush.msra.mxu0 0.0
        %235 = vmatpush.msra.mxu0 0.0
        %236 = vmatpush.msra.mxu0 0.0
        %237 = vmatpush.msra.mxu0 0.0
        %238 = vmatpush.msra.mxu0 0.0
        %239 = vmatpush.msra.mxu0 0.0
        %240 = vmatpush.msra.mxu0 0.0
        %241 = vmatpush.msra.mxu0 0.0
        %242 = vmatpush.msra.mxu0 0.0
        %243 = vmatpush.msra.mxu0 0.0
        %244 = vmatpush.msra.mxu0 0.0
        %245 = vmatpush.msra.mxu0 %v226
        %246 = vmatmul.f32.gmra.mxu0 %v223
        %v247 = vpop.f32.mrf.mxu0
        %v248 = vadd.f32 %v215, %v247
        %249 = vdwg.mxu0
        %250 = vmatpush.msra.mxu0 0.0
        %251 = vmatpush.msra.mxu0 0.0
        %252 = vmatpush.msra.mxu0 0.0
        %253 = vmatpush.msra.mxu0 0.0
        %254 = vmatpush.msra.mxu0 0.0
        %255 = vmatpush.msra.mxu0 0.0
        %256 = vmatpush.msra.mxu0 0.0
        %257 = vmatpush.msra.mxu0 0.0
        %258 = vmatpush.msra.mxu0 0.0
        %259 = vmatpush.msra.mxu0 0.0
        %260 = vmatpush.msra.mxu0 0.0
        %261 = vmatpush.msra.mxu0 0.0
        %262 = vmatpush.msra.mxu0 0.0
        %263 = vmatpush.msra.mxu0 0.0
        %264 = vmatpush.msra.mxu0 0.0
        %265 = vmatpush.msra.mxu0 %v228
        %266 = vmatmul.f32.gmra.mxu0 %v223
        %v267 = vpop.f32.mrf.mxu0
        %v268 = vadd.f32 %v215, %v267
        %269 = vdwg.mxu0
        %v272 = vrot.slane %v268, 6
        %vm273 = vcmask 1041408
        %v274 = vsel %vm273, %v248, %v272
        %276 = vst [vmem:[%s206] sm:$0xf] %v274
        %s277 = sand.u32 %s112, 1
        %s278 = scalar_lea.sflag [#allocation4], %s277
        %s279 = sand.u32 %s112, 1
        %s280 = smul.addr %s279, 4
        %s281 = scalar_lea.vmem [#allocation5], %s280
        // Predicated region
        $region37: #{tpu_custom_call.1} parent=31 // pred_check
          %p282 = pneg %p122
        $region38: #{tpu_custom_call.1} parent=31 // pred_check_branch
          %284 = sbr.rel (%p282) target = $region40
        $region39: #{tpu_custom_call.1} parent=31 // pred_region
          %s285 = smul.u32 2, %s25
          %287 = vsyncadd %s278, 0
          %s288 = smul.addr %s24, 2
          %s289 = sadd.s32 %s285, %s288
          %s290 = smul.addr %s289, 2
          %s291 = scalar_lea.hbm %s3, %s290
          %s293 = sshll.u32 %s281, 4
          %s294 = int_to_ptr.vmem [resolvable:$true] %s293
          %s295 = sshll.u32 %s291, 4
          %s296 = int_to_ptr.hbm [resolvable:$true] %s295
          %298 = dma.vmem_to_hbm [thread:$0]  %s294, 64, %s296, %s278
        $region40: #{tpu_custom_call.1} parent=31 // pred_fallthru
          _
      $region32: #{tpu_custom_call.1} parent=5 // pred_fallthru
        _
      %p299 = scmp.le.s32.totalorder 2, %s15
      // Predicated region
      $region41: #{tpu_custom_call.1} parent=5 // pred_check
        %p300 = pneg %p299
      $region42: #{tpu_custom_call.1} parent=5 // pred_check_branch
        %302 = sbr.rel (%p300) target = $region44
      $region43: #{tpu_custom_call.1} parent=5 // pred_region
        %s303 = ssub.s32 %s15, 2
        // Predicated region
        $region45: #{tpu_custom_call.1} parent=43 // pred_check
          %p304 = pneg %p128
        $region46: #{tpu_custom_call.1} parent=43 // pred_check_branch
          %306 = sbr.rel (%p304) target = $region48
        $region47: #{tpu_custom_call.1} parent=43 // pred_region
          %s307 = sand.u32 %s113, 1
          %s308 = scalar_lea.sflag [#allocation4], %s307
          %s309 = sand.u32 %s113, 1
          %s310 = smul.addr %s309, 4
          %s311 = scalar_lea.vmem [#allocation5], %s310
          %313 = dma.done %s308, 64
        $region48: #{tpu_custom_call.1} parent=43 // pred_fallthru
          _
      $region44: #{tpu_custom_call.1} parent=5 // pred_fallthru
        _
    $region6: #{tpu_custom_call.1} parent=1 // loop_footer
      %s19 = sadd.s32 1, %s15
    $region7: #{tpu_custom_call.1} parent=1 // loop_footer_branch
      %14 = sbr.rel target = $region3
    $region8: #{tpu_custom_call.1} parent=1 // loop_exit
      _
    %314 = vsyncpa [#allocation3], 1
    %s315 = scalar_lea.sflag [#allocation3], 1
    %316 = vsyncpa %s315, 1
    %317 = vsyncpa [#allocation4], 1
    %s318 = scalar_lea.sflag [#allocation4], 1
    %319 = vsyncpa %s318, 1

</llo_original>
